<compile_context>
chip_gen: v6e
topology: v6e:2x2x1
jax: 0.10.0
libtpu: 0.0.40
codegen_flags: <defaults>
</compile_context>

<pallas_src>
import functools

import numpy as np
import jax
import jax.numpy as jnp
from jax import lax
from jax.experimental import pallas as pl
from jax.experimental.pallas import tpu as pltpu


# ----------------------------- Pallas kernels ------------------------------

def _conv_matmul_kernel(p_ref, w_ref, o_ref, *, negative_slope):
    """Transposed im2col conv tile with optional fused leaky_relu.

    p_ref: (K, TP)      patches tile, K = kh*kw*Cin, TP pixels on lanes
    w_ref: (Cout, K)    spectral-normalized weight matrix
    o_ref: (Cout, TP)   output tile (lane-dense)
    """
    acc = jnp.dot(w_ref[...], p_ref[...], preferred_element_type=jnp.float32)
    if negative_slope is not None:
        acc = jnp.where(acc >= 0, acc, acc * negative_slope)
    o_ref[...] = acc.astype(o_ref.dtype)


def _layernorm_lrelu_kernel(x_ref, g_ref, b_ref, o_ref, *, eps, negative_slope):
    """Per-sample LayerNorm over the full (C, P) block (== LN over [C,H,W]),
    fused with leaky_relu."""
    x = x_ref[...].astype(jnp.float32)
    cnt = x.shape[0] * x.shape[1]
    mean = jnp.sum(x) / cnt
    xc = x - mean
    var = jnp.sum(xc * xc) / cnt                    # biased variance (torch LN)
    inv = lax.rsqrt(var + eps)
    y = xc * inv * g_ref[...] + b_ref[...]
    y = jnp.where(y >= 0, y, y * negative_slope)
    o_ref[...] = y.astype(o_ref.dtype)


# ------------------------------ wrappers ------------------------------------

def _round_up(x, m):
    return (x + m - 1) // m * m


def _im2col_nchw(x, k, stride, pad):
    """x: (N, C, H, W) -> patches (N, K, P) with K-order (dy, dx, c)."""
    x = jnp.pad(x, ((0, 0), (0, 0), (pad, pad), (pad, pad)))
    n, c, hp, wp = x.shape
    hout = (hp - k) // stride + 1
    wout = (wp - k) // stride + 1
    cols = []
    for dy in range(k):
        for dx in range(k):
            cols.append(x[:, :, dy:dy + stride * (hout - 1) + 1:stride,
                                dx:dx + stride * (wout - 1) + 1:stride])
    patches = jnp.concatenate(cols, axis=1)          # (N, k*k*C, Hout, Wout)
    return patches.reshape(n, k * k * c, hout * wout), hout, wout


def conv_sn(x_nchw, w_oihw, *, stride=1, pad=1, negative_slope=None,
            compute_dtype=jnp.bfloat16):
    """ZeroPad2d(pad) + Conv2d(k=2, stride, bias=False); weight already
    spectral-norm scaled.  Pixel axis tiled and placed on the lane axis."""
    cout, cin, kh, kw = w_oihw.shape
    patches, hout, wout = _im2col_nchw(x_nchw, kh, stride, pad)
    n, kdim, p = patches.shape

    tp = 512 if p > 2048 else 128                   # lane tile (multiple of 128)
    p_pad = _round_up(p, tp)
    if p_pad != p:
        patches = jnp.pad(patches, ((0, 0), (0, 0), (0, p_pad - p)))
    patches = patches.astype(compute_dtype)

    # (Cout, Cin, kh, kw) -> (Cout, kh*kw*Cin), matching the (dy, dx, c) order.
    w_mat = jnp.transpose(w_oihw, (0, 2, 3, 1)).reshape(cout, kdim)
    w_mat = w_mat.astype(compute_dtype)

    out = pl.pallas_call(
        functools.partial(_conv_matmul_kernel, negative_slope=negative_slope),
        out_shape=jax.ShapeDtypeStruct((n, cout, p_pad), compute_dtype),
        grid=(n, p_pad // tp),
        in_specs=[pl.BlockSpec((None, kdim, tp), lambda i, j: (i, 0, j)),
                  pl.BlockSpec((cout, kdim), lambda i, j: (0, 0))],
        out_specs=pl.BlockSpec((None, cout, tp), lambda i, j: (i, 0, j)),
        compiler_params=pltpu.CompilerParams(
            dimension_semantics=("parallel", "parallel")),
    )(patches, w_mat)

    return out[:, :, :p].reshape(n, cout, hout, wout)


def layernorm_lrelu(x_nchw, gamma_chw, beta_chw, *, eps, negative_slope,
                    out_dtype=None):
    n, c, h, w = x_nchw.shape
    p = h * w
    out_dtype = x_nchw.dtype if out_dtype is None else out_dtype
    xf = x_nchw.reshape(n, c, p)
    g = gamma_chw.reshape(c, p).astype(jnp.float32)
    b = beta_chw.reshape(c, p).astype(jnp.float32)
    out = pl.pallas_call(
        functools.partial(_layernorm_lrelu_kernel, eps=eps,
                          negative_slope=negative_slope),
        out_shape=jax.ShapeDtypeStruct((n, c, p), out_dtype),
        grid=(n,),
        in_specs=[pl.BlockSpec((None, c, p), lambda i: (i, 0, 0)),
                  pl.BlockSpec((c, p), lambda i: (0, 0)),
                  pl.BlockSpec((c, p), lambda i: (0, 0))],
        out_specs=pl.BlockSpec((None, c, p), lambda i: (i, 0, 0)),
        compiler_params=pltpu.CompilerParams(dimension_semantics=("parallel",)),
    )(xf, g, b)
    return out.reshape(n, c, h, w)


# ------------------------- parameters / forward ------------------------------

def _conv_weight(key, cin, cout, k=2):
    # Conv2d default init: kaiming_uniform(a=sqrt(5)) -> U(-1/sqrt(fan_in), +).
    bound = 1.0 / np.sqrt(cin * k * k)
    w = jax.random.uniform(key, (cout, cin, k, k), jnp.float32, -bound, bound)
    # spectral_norm: divide by the top singular value of w.reshape(cout, -1).
    sigma = jnp.linalg.norm(w.reshape(cout, -1), ord=2)
    return w / sigma                                 # OIHW (torch layout)


def init_discriminator_params(key, in_ch=3, base_n_ch=8, n_dis=2, in_hw=16):
    keys = iter(jax.random.split(key, 16))
    params = {}
    channels = base_n_ch // 2
    prev = channels
    params["conv_0"] = _conv_weight(next(keys), in_ch, channels)
    conv_list = []
    for _ in range(1, n_dis):
        w_s2 = _conv_weight(next(keys), prev, channels * 2)
        w_s1 = _conv_weight(next(keys), channels * 2, channels * 4)
        conv_list.append((w_s2, w_s1))
        prev = channels * 4
        channels = channels * 2
    params["conv_list"] = conv_list
    params["last_conv"] = _conv_weight(next(keys), prev, channels * 2)

    # LayerNorm([channels*2, H_ln, W_ln]); the original module hardcodes 68x68
    # (for 256x256 inputs) — here derived from the actual small input size.
    def _out_hw(h, s):
        return (h + 2 - 2) // s + 1

    h = _out_hw(in_hw, 1)
    for _ in range(1, n_dis):
        h = _out_hw(h, 2)
        h = _out_hw(h, 1)
    h = _out_hw(h, 1)                                # last_conv
    c_ln = channels * 2
    params["ln_gamma"] = jnp.ones((c_ln, h, h), jnp.float32)   # (C, H, W), torch layout
    params["ln_beta"] = jnp.zeros((c_ln, h, h), jnp.float32)
    params["d_logit"] = _conv_weight(next(keys), c_ln, 1)
    return params


def discriminator_forward(x_nchw, params, compute_dtype=jnp.bfloat16):
    x = x_nchw
    x = conv_sn(x, params["conv_0"], stride=1, pad=1, negative_slope=0.2,
                compute_dtype=compute_dtype)
    for w_s2, w_s1 in params["conv_list"]:
        x = conv_sn(x, w_s2, stride=2, pad=1, negative_slope=0.2,
                    compute_dtype=compute_dtype)
        x = conv_sn(x, w_s1, stride=1, pad=1, negative_slope=0.2,
                    compute_dtype=compute_dtype)
    x = conv_sn(x, params["last_conv"], stride=1, pad=1, negative_slope=None,
                compute_dtype=compute_dtype)
    x = layernorm_lrelu(x, params["ln_gamma"], params["ln_beta"],
                        eps=1e-5, negative_slope=0.2, out_dtype=compute_dtype)
    x = conv_sn(x, params["d_logit"], stride=1, pad=1, negative_slope=None,
                compute_dtype=compute_dtype)
    return x.astype(jnp.float32)


# ------------------------- pure-JAX reference --------------------------------

def _ref_conv(x, w, stride):
    return lax.conv_general_dilated(
        x, w, window_strides=(stride, stride), padding=((1, 1), (1, 1)),
        dimension_numbers=("NCHW", "OIHW", "NCHW"),
        precision=lax.Precision.HIGHEST)


def reference_forward(x_nchw, params):
    lrelu = lambda v: jnp.where(v >= 0, v, 0.2 * v)
    x = x_nchw
    x = lrelu(_ref_conv(x, params["conv_0"], 1))
    for w_s2, w_s1 in params["conv_list"]:
        x = lrelu(_ref_conv(x, w_s2, 2))
        x = lrelu(_ref_conv(x, w_s1, 1))
    x = _ref_conv(x, params["last_conv"], 1)
    mean = jnp.mean(x, axis=(1, 2, 3), keepdims=True)
    var = jnp.mean((x - mean) ** 2, axis=(1, 2, 3), keepdims=True)
    x = (x - mean) * lax.rsqrt(var + 1e-5) * params["ln_gamma"] + params["ln_beta"]
    x = lrelu(x)
    x = _ref_conv(x, params["d_logit"], 1)
    return x


if __name__ == "__main__":
    key = jax.random.PRNGKey(0)
    kp, kx = jax.random.split(key)

    N, C_IN, HW = 2, 3, 16                           # small shapes
    params = init_discriminator_params(kp, in_ch=C_IN, base_n_ch=8,
                                       n_dis=2, in_hw=HW)
    x = jax.random.normal(kx, (N, C_IN, HW, HW), jnp.float32)

    ref = jax.block_until_ready(reference_forward(x, params))

    # Exact-precision path: tight check against the f32 reference.
    out_f32 = jax.block_until_ready(
        discriminator_forward(x, params, compute_dtype=jnp.float32))
    assert out_f32.shape == (N, 1, 12, 12), out_f32.shape
    np.testing.assert_allclose(np.asarray(out_f32), np.asarray(ref),
                               rtol=2e-2, atol=2e-2)

    # Fast bf16-operand path (default): finite + close to the f32 reference.
    out_bf16 = jax.block_until_ready(
        discriminator_forward(x, params, compute_dtype=jnp.bfloat16))
    assert out_bf16.shape == (N, 1, 12, 12), out_bf16.shape
    assert bool(jnp.all(jnp.isfinite(out_bf16)))
    np.testing.assert_allclose(np.asarray(out_bf16), np.asarray(ref),
                               rtol=1e-1, atol=1e-1)

    print("KERNEL_OK")
</pallas_src>

<mosaic_0001>
module attributes {stable_mosaic.version = 11 : i64} {
  func.func @_conv_matmul_kernel(%arg0: i32, %arg1: i32, %arg2: memref<1x12x128xf32, #tpu.memory_space<vmem>>, %arg3: memref<4x12xf32, #tpu.memory_space<vmem>>, %arg4: memref<1x4x128xf32, #tpu.memory_space<vmem>>) attributes {dimension_semantics = [#tpu.dimension_semantics<parallel>, #tpu.dimension_semantics<parallel>], iteration_bounds = array<i64: 2, 3>, scalar_prefetch = 0 : i64, scratch_operands = 0 : i64, tpu.core_type = #tpu.core_type<tc>, window_params = [{transform_indices = @transform_0, window_bounds = array<i64: 1, 12, 128>}, {pipeline_mode = #tpu.pipeline_mode<synchronous>, transform_indices = @transform_1, window_bounds = array<i64: 4, 12>}, {transform_indices = @transform_2, window_bounds = array<i64: 1, 4, 128>}]} {
    %c0 = arith.constant 0 : index
    %c0_0 = arith.constant 0 : index
    %0 = vector.load %arg3[%c0, %c0_0] : memref<4x12xf32, #tpu.memory_space<vmem>>, vector<4x12xf32>
    %c0_1 = arith.constant 0 : index
    %c0_2 = arith.constant 0 : index
    %c0_3 = arith.constant 0 : index
    %1 = vector.load %arg2[%c0_1, %c0_2, %c0_3] : memref<1x12x128xf32, #tpu.memory_space<vmem>>, vector<1x12x128xf32>
    %2 = vector.shape_cast %1 : vector<1x12x128xf32> to vector<12x128xf32>
    %cst = arith.constant dense<0.000000e+00> : vector<4x128xf32>
    %3 = tpu.matmul %0, %2, %cst {dimension_numbers = #tpu.dot_dimension_numbers<[1], [0], [0], [1], [0, 0, 1, 1], [], []>} : vector<4x12xf32>, vector<12x128xf32>, vector<4x128xf32> -> vector<4x128xf32>
    %cst_4 = arith.constant 0.000000e+00 : f32
    %4 = vector.broadcast %cst_4 : f32 to vector<4x128xf32>
    %5 = arith.cmpf oge, %3, %4 : vector<4x128xf32>
    %cst_5 = arith.constant 2.000000e-01 : f32
    %6 = vector.broadcast %cst_5 : f32 to vector<4x128xf32>
    %7 = arith.mulf %3, %6 : vector<4x128xf32>
    %8 = arith.select %5, %3, %7 : vector<4x128xi1>, vector<4x128xf32>
    %c0_6 = arith.constant 0 : index
    %c0_7 = arith.constant 0 : index
    %c0_8 = arith.constant 0 : index
    %9 = vector.load %arg4[%c0_6, %c0_7, %c0_8] : memref<1x4x128xf32, #tpu.memory_space<vmem>>, vector<1x4x128xf32>
    %10 = vector.shape_cast %9 : vector<1x4x128xf32> to vector<4x128xf32>
    %11 = vector.shape_cast %8 : vector<4x128xf32> to vector<1x4x128xf32>
    tpu.vector_store %arg4[%c0_6, %c0_7, %c0_8], %11 {strides = array<i32>} : memref<1x4x128xf32, #tpu.memory_space<vmem>>, vector<1x4x128xf32>,
    return
  }
  func.func @transform_0(%arg0: i32, %arg1: i32) -> (i32, i32, i32) {
    %c0_i32 = arith.constant 0 : i32
    %c0_i32_0 = arith.constant 0 : i32
    return %arg0, %c0_i32, %arg1 : i32, i32, i32
  }
  func.func @transform_1(%arg0: i32, %arg1: i32) -> (i32, i32) {
    %c0_i32 = arith.constant 0 : i32
    %c0_i32_0 = arith.constant 0 : i32
    %c0_i32_1 = arith.constant 0 : i32
    return %c0_i32, %c0_i32_0 : i32, i32
  }
  func.func @transform_2(%arg0: i32, %arg1: i32) -> (i32, i32, i32) {
    %c0_i32 = arith.constant 0 : i32
    %c0_i32_0 = arith.constant 0 : i32
    return %arg0, %c0_i32, %arg1 : i32, i32, i32
  }
}

</mosaic_0001>

<llo_original>
// kernel: tpu_custom_call.1
$region0: #{tpu_custom_call.1}
  #allocation0 [shape = 'u32[]', space=smem, size = 0x4, offset = 0x4, fixed_abs, tag = 'smem constant byte address 0x4 - core index']
  #allocation1 [shape = 'u32[144,128]{1,0:T(1,128)}', space=vmem, size = 0x12000, scoped, tag = 'internal scratch']
  %s0 = inlined_call_operand.vmem [shape: f32[2,12,384], index: 0, kind: input, shape index: {}]
  %s1 = inlined_call_operand.vmem [shape: f32[4,12], index: 1, kind: input, shape index: {}]
  %s2 = inlined_call_operand.hbm [shape: f32[2,4,384], index: 2, kind: output, shape index: {}]
  %s3 = sld [smem:[#allocation0]]
  $region79: #{tpu_custom_call.1} parent=0
    _
  %s5 = ssub.s32 1, %s3
  %s6 = scalar_select 0, %s5, %s3
  $region1: #{tpu_custom_call.1} parent=0
    #allocation2 [shape = 'u8[16384]{0}', space=vmem, size = 0x4000, scoped, tag = 'input window, operand 0']
    #allocation3 [shape = 'u8[4096]{0}', space=vmem, size = 0x1000, scoped, tag = 'output window, operand 0']
    #allocation4 [shape = 's32[2]{0}', space=sflag, size = 0x8, scoped, tag = 'scoped memory for tpu_custom_call.1']
    %7 = vsyncpa [#allocation4], 0
    %s8 = scalar_lea.sflag [#allocation4], 1
    %9 = vsyncpa %s8, 0
    loop: start=0, step=1, limit=8
    $region2: #{tpu_custom_call.1} parent=1 // loop_pre_header
      _
    $region3: #{tpu_custom_call.1} parent=1 // loop_header
      %s11 = sphi 0, %s15
      %p12 = scmp.ge.s32.totalorder %s11, 8
      %s18 = sphi 0, %s30
      %s19 = sphi 0, %s26
      %s20 = sphi 0, %s18
      %s21 = sphi 0, %s19
      %s22 = sphi 0, %s20
      %s23 = sphi 0, %s21
      %s35 = sphi 0, %s37
      %s38 = sphi 0, %s35
      %s39 = sphi 0, %s38
      %s55 = sphi 0, %s39
      %s59 = sphi 0, %s59
      %s61 = sphi 0, %s59
      %s62 = sphi 0, %s61
      %s76 = sphi 0, %s62
      %s84 = sphi 0, %s86
      %s87 = sphi 0, %s84
      %s88 = sphi 0, %s87
      %s104 = sphi 0, %s88
    $region4: #{tpu_custom_call.1} parent=1 // loop_header_branch
      %14 = sbr.rel (%p12) target = $region8
    $region5: #{tpu_custom_call.1} parent=1 // loop_body
      %s16 = ssub.s32 %s11, 1
      %s17 = ssub.s32 %s11, 2
      %s24 = sadd.s32 1, %s19
      %p25 = scmp.ge.s32.totalorder %s24, 3
      %s26 = scalar_select %p25, 0, %s24
      %s27 = sadd.s32 1, %s18
      %s28 = scalar_select %p25, %s27, %s18
      %p29 = scmp.ge.s32.totalorder %s28, 2
      %s30 = scalar_select %p29, 0, %s28
      %s31 = ssub.s32 %s18, %s30
      %s32 = ssub.s32 %s19, %s26
      %s33 = sor.u32 %s31, %s32
      %p34 = scmp.eq.s32.totalorder %s33, 0
      %s36 = sadd.s32 %s35, 1
      %s37 = scalar_select %p34, %s35, %s36
      %p40 = pneg %p34
      %p41 = scmp.eq.s32.totalorder %s11, 5
      %p42 = por %p40, %p41
      %p43 = scmp.ne.s32.totalorder %s35, %s38
      %p44 = scmp.eq.s32.totalorder %s11, 0
      %p45 = por %p43, %p44
      %p46 = scmp.ne.s32.totalorder %s35, %s38
      %p47 = scmp.eq.s32.totalorder %s16, 5
      %p48 = por %p46, %p47
      %p49 = scmp.ne.s32.totalorder %s38, %s39
      %p50 = scmp.eq.s32.totalorder %s16, 0
      %p51 = por %p49, %p50
      %p52 = scmp.ne.s32.totalorder %s38, %s39
      %p53 = scmp.eq.s32.totalorder %s17, 5
      %p54 = por %p52, %p53
      %p56 = scmp.ne.s32.totalorder %s39, %s55
      %p57 = scmp.eq.s32.totalorder %s17, 0
      %p58 = por %p56, %p57
      %s60 = sadd.s32 %s59, 1
      %p63 = scmp.eq.s32.totalorder %s11, 5
      %p64 = scmp.ne.s32.totalorder %s59, %s61
      %p65 = scmp.eq.s32.totalorder %s11, 0
      %p66 = por %p64, %p65
      %p67 = scmp.ne.s32.totalorder %s59, %s61
      %p68 = scmp.eq.s32.totalorder %s16, 5
      %p69 = por %p67, %p68
      %p70 = scmp.ne.s32.totalorder %s61, %s62
      %p71 = scmp.eq.s32.totalorder %s16, 0
      %p72 = por %p70, %p71
      %p73 = scmp.ne.s32.totalorder %s61, %s62
      %p74 = scmp.eq.s32.totalorder %s17, 5
      %p75 = por %p73, %p74
      %p77 = scmp.ne.s32.totalorder %s62, %s76
      %p78 = scmp.eq.s32.totalorder %s17, 0
      %p79 = por %p77, %p78
      %s80 = ssub.s32 %s18, %s30
      %s81 = ssub.s32 %s19, %s26
      %s82 = sor.u32 %s80, %s81
      %p83 = scmp.eq.s32.totalorder %s82, 0
      %s85 = sadd.s32 %s84, 1
      %s86 = scalar_select %p83, %s84, %s85
      %p89 = pneg %p83
      %p90 = scmp.eq.s32.totalorder %s11, 5
      %p91 = por %p89, %p90
      %p92 = scmp.ne.s32.totalorder %s84, %s87
      %p93 = scmp.eq.s32.totalorder %s11, 0
      %p94 = por %p92, %p93
      %p95 = scmp.ne.s32.totalorder %s84, %s87
      %p96 = scmp.eq.s32.totalorder %s16, 5
      %p97 = por %p95, %p96
      %p98 = scmp.ne.s32.totalorder %s87, %s88
      %p99 = scmp.eq.s32.totalorder %s16, 0
      %p100 = por %p98, %p99
      %p101 = scmp.ne.s32.totalorder %s87, %s88
      %p102 = scmp.eq.s32.totalorder %s17, 5
      %p103 = por %p101, %p102
      %p105 = scmp.ne.s32.totalorder %s88, %s104
      %p106 = scmp.eq.s32.totalorder %s17, 0
      %p107 = por %p105, %p106
      %p108 = scmp.le.s32.totalorder 1, %s11
      %p109 = scmp.lt.s32.totalorder %s11, 7
      %p110 = pnand %p108, %p109
      %p111 = pneg %p110
      // Predicated region
      $region9: #{tpu_custom_call.1} parent=5 // pred_check
        _
      $region10: #{tpu_custom_call.1} parent=5 // pred_check_branch
        %113 = sbr.rel (%p110) target = $region12
      $region11: #{tpu_custom_call.1} parent=5 // pred_region
        %s114 = ssub.s32 %s11, 1
        // Predicated region
        $region13: #{tpu_custom_call.1} parent=11 // pred_check
          %p115 = pneg %p72
        $region14: #{tpu_custom_call.1} parent=11 // pred_check_branch
          %117 = sbr.rel (%p115) target = $region16
        $region15: #{tpu_custom_call.1} parent=11 // pred_region
          _
        $region16: #{tpu_custom_call.1} parent=11 // pred_fallthru
          _
      $region12: #{tpu_custom_call.1} parent=5 // pred_fallthru
        _
      %p118 = scmp.lt.s32.totalorder %s11, 6
      // Predicated region
      $region17: #{tpu_custom_call.1} parent=5 // pred_check
        %p119 = pneg %p118
      $region18: #{tpu_custom_call.1} parent=5 // pred_check_branch
        %121 = sbr.rel (%p119) target = $region20
      $region19: #{tpu_custom_call.1} parent=5 // pred_region
        // Predicated region
        $region21: #{tpu_custom_call.1} parent=19 // pred_check
          %p122 = pneg %p45
        $region22: #{tpu_custom_call.1} parent=19 // pred_check_branch
          %124 = sbr.rel (%p122) target = $region24
        $region23: #{tpu_custom_call.1} parent=19 // pred_region
          %s125 = sand.u32 %s35, 1
          %s126 = sand.u32 %s35, 1
          %s127 = smul.addr %s126, 16
          %s128 = scalar_lea.vmem [#allocation2], %s127
          %s129 = smul.addr %s18, 6
          %s130 = sadd.s32 %s19, %s129
          %s131 = smul.addr %s130, 8
          %s132 = scalar_lea.vmem %s0, %s131
          // Predicated region
          $region25: #{tpu_custom_call.1} parent=23 // pred_check
            _
          $region26: #{tpu_custom_call.1} parent=23 // pred_check_branch
            %134 = sbr.rel (0) target = $region28
          $region27: #{tpu_custom_call.1} parent=23 // pred_region
            // Predicated region
            $region29: #{tpu_custom_call.1} parent=27 // pred_check
              _
            $region30: #{tpu_custom_call.1} parent=27 // pred_check_branch
              %136 = sbr.rel (0) target = $region32
            $region31: #{tpu_custom_call.1} parent=27 // pred_region
              // Predicated region
              $region44: #{tpu_custom_call.1} parent=31 // pred_check
                _
              $region45: #{tpu_custom_call.1} parent=31 // pred_check_branch
                %154 = sbr.rel (0) target = $region47
              $region46: #{tpu_custom_call.1} parent=31 // pred_region
                loop: start=0, step=1, limit=1
                $region48: #{tpu_custom_call.1} parent=46 // loop_pre_header
                  _
                $region49: #{tpu_custom_call.1} parent=46 // loop_header
                  %s156 = sphi 0, %s160
                  %p157 = scmp.ge.s32.totalorder %s156, 1
                  %s161 = sphi %s132, %s132
                  %s162 = sphi %s128, %s128
                $region50: #{tpu_custom_call.1} parent=46 // loop_header_branch
                  %159 = sbr.rel (%p157) target = $region54
                $region51: #{tpu_custom_call.1} parent=46 // loop_body
                  %v163 = vld [vmem:[%s161] sm:$0xff]
                  %164 = vst [vmem:[%s162] sm:$0xff] %v163
                  %v165 = vld [vmem:[%s161 + $0x18] sm:$0xff]
                  %166 = vst [vmem:[%s162 + $0x8] sm:$0xff] %v165
                $region52: #{tpu_custom_call.1} parent=46 // loop_footer
                  %s160 = sadd.s32 1, %s156
                $region53: #{tpu_custom_call.1} parent=46 // loop_footer_branch
                  %155 = sbr.rel target = $region49
                $region54: #{tpu_custom_call.1} parent=46 // loop_exit
                  _
              $region47: #{tpu_custom_call.1} parent=31 // pred_fallthru
                _
              // Predicated region
              $region55: #{tpu_custom_call.1} parent=31 // pred_check
                _
              $region56: #{tpu_custom_call.1} parent=31 // pred_check_branch
                %168 = sbr.rel target = $region58
              $region57: #{tpu_custom_call.1} parent=31 // pred_region
                _
              $region58: #{tpu_custom_call.1} parent=31 // pred_fallthru
                _
            $region32: #{tpu_custom_call.1} parent=27 // pred_fallthru
              _
            // Predicated region
            $region33: #{tpu_custom_call.1} parent=27 // pred_check
              _
            $region34: #{tpu_custom_call.1} parent=27 // pred_check_branch
              %138 = sbr.rel target = $region36
            $region35: #{tpu_custom_call.1} parent=27 // pred_region
              %s140 = ssub.s32 256, 1
              loop: start=0, step=1, limit=1
              $region37: #{tpu_custom_call.1} parent=35 // loop_pre_header
                _
              $region38: #{tpu_custom_call.1} parent=35 // loop_header
                %s142 = sphi 0, %s146
                %p143 = scmp.ge.s32.totalorder %s142, 1
                %s147 = sphi %s132, %s132
                %s148 = sphi %s128, %s128
              $region39: #{tpu_custom_call.1} parent=35 // loop_header_branch
                %145 = sbr.rel (%p143) target = $region43
              $region40: #{tpu_custom_call.1} parent=35 // loop_body
                %v149 = vld [vmem:[%s147] sm:%s140]
                %150 = vst [vmem:[%s148] sm:%s140] %v149
                %v151 = vld [vmem:[%s147 + $0x18] sm:%s140]
                %152 = vst [vmem:[%s148 + $0x8] sm:%s140] %v151
              $region41: #{tpu_custom_call.1} parent=35 // loop_footer
                %s146 = sadd.s32 1, %s142
              $region42: #{tpu_custom_call.1} parent=35 // loop_footer_branch
                %141 = sbr.rel target = $region38
              $region43: #{tpu_custom_call.1} parent=35 // loop_exit
                _
            $region36: #{tpu_custom_call.1} parent=27 // pred_fallthru
              _
          $region28: #{tpu_custom_call.1} parent=23 // pred_fallthru
            _
          %169 = vnop
        $region24: #{tpu_custom_call.1} parent=19 // pred_fallthru
          _
      $region20: #{tpu_custom_call.1} parent=5 // pred_fallthru
        _
      %p170 = scmp.le.s32.totalorder 1, %s11
      %p171 = scmp.lt.s32.totalorder %s11, 7
      %p172 = pnand %p170, %p171
      %p173 = pneg %p172
      // Predicated region
      $region59: #{tpu_custom_call.1} parent=5 // pred_check
        _
      $region60: #{tpu_custom_call.1} parent=5 // pred_check_branch
        %175 = sbr.rel (%p172) target = $region62
      $region61: #{tpu_custom_call.1} parent=5 // pred_region
        %s176 = ssub.s32 %s11, 1
        %s177 = sand.u32 %s38, 1
        %s178 = sand.u32 %s38, 1
        %s179 = smul.addr %s178, 16
        %s180 = scalar_lea.vmem [#allocation2], %s179
        // Predicated region
        $region63: #{tpu_custom_call.1} parent=61 // pred_check
          %p181 = pneg %p51
        $region64: #{tpu_custom_call.1} parent=61 // pred_check_branch
          %183 = sbr.rel (%p181) target = $region66
        $region65: #{tpu_custom_call.1} parent=61 // pred_region
          _
        $region66: #{tpu_custom_call.1} parent=61 // pred_fallthru
          _
        %s184 = sand.u32 %s38, 1
        %s185 = sand.u32 %s38, 1
        %s186 = smul.addr %s185, 16
        %s187 = scalar_lea.vmem [#allocation2], %s186
        %p188 = pneg %p51
        %p189 = pneg %p48
        %p190 = pneg %p72
        %p191 = pneg %p69
        %p192 = pneg %p100
        %p193 = pneg %p97
        %s194 = sand.u32 %s87, 1
        %s195 = scalar_lea.sflag [#allocation4], %s194
        %s196 = sand.u32 %s87, 1
        %s197 = smul.addr %s196, 4
        %s198 = scalar_lea.vmem [#allocation3], %s197
        %v199 = vld [vmem:[%s1] sm:$0xf]
        %v200 = vld [vmem:[%s180] sm:$0xff]
        %v201 = vld [vmem:[%s180 + $0x8] sm:$0xf]
        %vm202 = vcmask 97280
        %v204 = vsel %vm202, %v199, 0
        %vm206 = vcmask 1043456
        %v208 = vsel %vm206, %v201, 0
        %210 = vmatprep.subr.mxu0 0.0
        %211 = vmatpush1.msra.mxu0 0.0
        %212 = vmatprep.subr.mxu0 0.0
        %213 = vmatpush1.msra.mxu0 0.0
        %214 = vmatprep.subr.mxu0 0.0
        %215 = vmatpush1.msra.mxu0 0.0
        %216 = vmatprep.subr.mxu0 0.0
        %217 = vmatpush1.msra.mxu0 0.0
        %218 = vmatprep.subr.mxu0 0.0
        %219 = vmatpush1.msra.mxu0 0.0
        %220 = vmatprep.subr.mxu0 0.0
        %221 = vmatpush1.msra.mxu0 0.0
        %222 = vmatprep.subr.mxu0 0.0
        %223 = vmatpush1.msra.mxu0 0.0
        %224 = vmatprep.subr.mxu0 0.0
        %225 = vmatpush1.msra.mxu0 0.0
        %226 = vmatprep.subr.mxu0 0.0
        %227 = vmatpush1.msra.mxu0 0.0
        %228 = vmatprep.subr.mxu0 0.0
        %229 = vmatpush1.msra.mxu0 0.0
        %230 = vmatprep.subr.mxu0 0.0
        %231 = vmatpush1.msra.mxu0 0.0
        %232 = vmatprep.subr.mxu0 0.0
        %233 = vmatpush1.msra.mxu0 0.0
        %234 = vmatprep.subr.mxu0 0.0
        %235 = vmatpush1.msra.mxu0 0.0
        %236 = vmatprep.subr.mxu0 0.0
        %237 = vmatpush1.msra.mxu0 0.0
        %238 = vmatprep.subr.mxu0 0.0
        %239 = vmatpush1.msra.mxu0 %v208
        %240 = vmatprep.subr.mxu0 0.0
        %241 = vmatpush1.msra.mxu0 %v200
        %242 = vmatprep.subr.mxu0 0.0
        %243 = vmatpush2.msra.mxu0 0.0
        %244 = vmatprep.subr.mxu0 0.0
        %245 = vmatpush2.msra.mxu0 0.0
        %246 = vmatprep.subr.mxu0 0.0
        %247 = vmatpush2.msra.mxu0 0.0
        %248 = vmatprep.subr.mxu0 0.0
        %249 = vmatpush2.msra.mxu0 0.0
        %250 = vmatprep.subr.mxu0 0.0
        %251 = vmatpush2.msra.mxu0 0.0
        %252 = vmatprep.subr.mxu0 0.0
        %253 = vmatpush2.msra.mxu0 0.0
        %254 = vmatprep.subr.mxu0 0.0
        %255 = vmatpush2.msra.mxu0 0.0
        %256 = vmatprep.subr.mxu0 0.0
        %257 = vmatpush2.msra.mxu0 0.0
        %258 = vmatprep.subr.mxu0 0.0
        %259 = vmatpush2.msra.mxu0 0.0
        %260 = vmatprep.subr.mxu0 0.0
        %261 = vmatpush2.msra.mxu0 0.0
        %262 = vmatprep.subr.mxu0 0.0
        %263 = vmatpush2.msra.mxu0 0.0
        %264 = vmatprep.subr.mxu0 0.0
        %265 = vmatpush2.msra.mxu0 0.0
        %266 = vmatprep.subr.mxu0 0.0
        %267 = vmatpush2.msra.mxu0 0.0
        %268 = vmatprep.subr.mxu0 0.0
        %269 = vmatpush2.msra.mxu0 0.0
        %270 = vmatprep.subr.mxu0 0.0
        %271 = vmatpush2.msra.mxu0 0.0
        %272 = vmatprep.subr.mxu0 0.0
        %273 = vmatpush2.msra.mxu0 0.0
        %274 = vmatprep.mubr.f32.mxu0 0.0
        %275 = vmatmul.mubr.f32.gmra.mxu0 %v204
        %v276 = vpop.f32.mrf.mxu0
        %v277 = vadd.f32 0.0, %v276
        %v278 = vpop.f32.mrf.mxu0
        %279 = vdwg.mxu0
        %vm280 = vcmp.ge.f32.partialorder %v277, 0.0
        %v281 = vmul.f32 %v277, 0.2
        %v282 = vsel %vm280, %v277, %v281
        %283 = vst [vmem:[%s198] sm:$0xf] %v282
        %s284 = sand.u32 %s87, 1
        %s285 = scalar_lea.sflag [#allocation4], %s284
        %s286 = sand.u32 %s87, 1
        %s287 = smul.addr %s286, 4
        %s288 = scalar_lea.vmem [#allocation3], %s287
        // Predicated region
        $region67: #{tpu_custom_call.1} parent=61 // pred_check
          %p289 = pneg %p97
        $region68: #{tpu_custom_call.1} parent=61 // pred_check_branch
          %291 = sbr.rel (%p289) target = $region70
        $region69: #{tpu_custom_call.1} parent=61 // pred_region
          %s293 = ssub.s32 64, 64
          %294 = vsyncadd %s285, %s293
          %s295 = smul.addr %s20, 3
          %s296 = sadd.s32 %s21, %s295
          %s297 = smul.addr %s296, 64
          %s298 = scalar_lea.hbm %s2, %s297
          %s300 = sshll.u32 %s288, 4
          %s301 = int_to_ptr.vmem [resolvable:$true] %s300
          %303 = dma.vmem_to_hbm [thread:$0]  %s301, 64, %s298, %s285
        $region70: #{tpu_custom_call.1} parent=61 // pred_fallthru
          _
      $region62: #{tpu_custom_call.1} parent=5 // pred_fallthru
        _
      %p304 = scmp.le.s32.totalorder 2, %s11
      // Predicated region
      $region71: #{tpu_custom_call.1} parent=5 // pred_check
        %p305 = pneg %p304
      $region72: #{tpu_custom_call.1} parent=5 // pred_check_branch
        %307 = sbr.rel (%p305) target = $region74
      $region73: #{tpu_custom_call.1} parent=5 // pred_region
        %s308 = ssub.s32 %s11, 2
        // Predicated region
        $region75: #{tpu_custom_call.1} parent=73 // pred_check
          %p309 = pneg %p103
        $region76: #{tpu_custom_call.1} parent=73 // pred_check_branch
          %311 = sbr.rel (%p309) target = $region78
        $region77: #{tpu_custom_call.1} parent=73 // pred_region
          %s312 = sand.u32 %s88, 1
          %s313 = scalar_lea.sflag [#allocation4], %s312
          %s314 = sand.u32 %s88, 1
          %s315 = smul.addr %s314, 4
          %s316 = scalar_lea.vmem [#allocation3], %s315
          %317 = dma.done %s313, 64
        $region78: #{tpu_custom_call.1} parent=73 // pred_fallthru
          _
      $region74: #{tpu_custom_call.1} parent=5 // pred_fallthru
        _
    $region6: #{tpu_custom_call.1} parent=1 // loop_footer
      %s15 = sadd.s32 1, %s11
    $region7: #{tpu_custom_call.1} parent=1 // loop_footer_branch
      %10 = sbr.rel target = $region3
    $region8: #{tpu_custom_call.1} parent=1 // loop_exit
      _
    %318 = vsyncpa [#allocation4], 1
    %s319 = scalar_lea.sflag [#allocation4], 1
    %320 = vsyncpa %s319, 1

</llo_original>
